<compile_context>
chip_gen: v6e
topology: v6e:2x2x1
jax: 0.10.0
libtpu: 0.0.40
codegen_flags: <defaults>
</compile_context>

<pallas_src>
import jax
import jax.numpy as jnp
from jax.experimental import pallas as pl
from jax.experimental.pallas import tpu as pltpu


def _round_up(x: int, m: int) -> int:
    return ((x + m - 1) // m) * m


def mean_agg_kernel(a_ref, hk_ref, hq_ref, w1_ref, w2_ref, o_ref, acc_ref):
    """One (row-tile i, reduction-tile k) grid step.

    a_ref  : (TM, TK)   bf16  adjacency tile (rows i, cols k)
    hk_ref : (TK, Fp)   bf16  node features for this reduction slab
    hq_ref : (TM, Fp)   bf16  node features for this row tile ("self" half)
    w1_ref : (Fp, Fop)  bf16  W[:, :F].T                (self half, padded)
    w2_ref : (Fp, Fop)  bf16  W[:, F:].T * (1/sum(A))   (agg half, padded)
    o_ref  : (TM, Fop)  f32   output tile
    acc_ref: (TM, Fp)   f32   running partial of A @ h
    """
    k = pl.program_id(1)

    @pl.when(k == 0)
    def _init():
        acc_ref[...] = jnp.zeros_like(acc_ref)

    # Partial mean-aggregation matmul (MXU, f32 accumulation).
    acc_ref[...] += jnp.dot(a_ref[...], hk_ref[...],
                            preferred_element_type=jnp.float32)

    @pl.when(k == pl.num_programs(1) - 1)
    def _finalize():
        h_agg = acc_ref[...].astype(hq_ref.dtype)   # 1/sum(A) already in w2
        out = (jnp.dot(hq_ref[...], w1_ref[...],
                       preferred_element_type=jnp.float32)
               + jnp.dot(h_agg, w2_ref[...],
                         preferred_element_type=jnp.float32))
        o_ref[...] = jnp.maximum(out, 0.0)


def mean_agg(h, A, W, *, tm=256, tk=512, compute_dtype=jnp.bfloat16,
             vmem_limit_bytes=None):
    """Pallas wrapper. h: (N, F), A: (N, N), W: (F_out, 2F) -> (N, F_out) f32."""
    h = jnp.asarray(h, jnp.float32)
    A = jnp.asarray(A, jnp.float32)
    W = jnp.asarray(W, jnp.float32)
    N, F = h.shape
    F_out = W.shape[0]
    assert A.shape == (N, N)
    assert W.shape == (F_out, 2 * F)

    # ---- wrapper-side (XLA) prep: global-sum fold, W split/transpose,
    #      lane-dense padding, bf16 cast ----
    inv_total = 1.0 / jnp.sum(A)            # torch.sparse.sum(A): global scalar
    w1_t = W[:, :F].T                       # (F, F_out)  "self" half
    w2_t = W[:, F:].T * inv_total           # (F, F_out)  "agg" half, scale folded

    Fp  = _round_up(F, 128)                 # lane-dense contraction dim
    Fop = _round_up(F_out, 128)             # lane-dense output dim
    tm  = min(tm, _round_up(N, 8))          # row tile
    tk  = min(tk, _round_up(N, 128))        # reduction (column) tile
    Nr  = _round_up(N, tm)                  # padded output rows
    Nc  = _round_up(N, tk)                  # padded reduction length

    cd = compute_dtype
    a_p  = jnp.zeros((Nr, Nc), cd).at[:N, :N].set(A.astype(cd))
    h_k  = jnp.zeros((Nc, Fp), cd).at[:N, :F].set(h.astype(cd))
    h_q  = jnp.zeros((Nr, Fp), cd).at[:N, :F].set(h.astype(cd))
    w1_p = jnp.zeros((Fp, Fop), cd).at[:F, :F_out].set(w1_t.astype(cd))
    w2_p = jnp.zeros((Fp, Fop), cd).at[:F, :F_out].set(w2_t.astype(cd))

    grid = (Nr // tm, Nc // tk)

    cp_kwargs = dict(dimension_semantics=("parallel", "arbitrary"))
    if vmem_limit_bytes is not None:
        cp_kwargs["vmem_limit_bytes"] = vmem_limit_bytes

    out = pl.pallas_call(
        mean_agg_kernel,
        out_shape=jax.ShapeDtypeStruct((Nr, Fop), jnp.float32),
        grid=grid,
        in_specs=[
            pl.BlockSpec((tm, tk), lambda i, k: (i, k)),     # A tile
            pl.BlockSpec((tk, Fp), lambda i, k: (k, 0)),     # h (reduction slab)
            pl.BlockSpec((tm, Fp), lambda i, k: (i, 0)),     # h (row tile, self)
            pl.BlockSpec((Fp, Fop), lambda i, k: (0, 0)),    # W1^T (resident)
            pl.BlockSpec((Fp, Fop), lambda i, k: (0, 0)),    # W2^T (resident)
        ],
        out_specs=pl.BlockSpec((tm, Fop), lambda i, k: (i, 0)),
        scratch_shapes=[pltpu.VMEM((tm, Fp), jnp.float32)],
        compiler_params=pltpu.CompilerParams(**cp_kwargs),
    )(a_p, h_k, h_q, w1_p, w2_p)

    return out[:N, :F_out]


def mean_agg_ref(h, A, W):
    """Pure-JAX f32 reference of the PyTorch forward."""
    h = h.astype(jnp.float32)
    A = A.astype(jnp.float32)
    W = W.astype(jnp.float32)
    h_agg = (A @ h) / jnp.sum(A)
    h_cat = jnp.concatenate([h, h_agg], axis=1)
    return jnp.maximum((W @ h_cat.T).T, 0.0)


if __name__ == "__main__":
    key = jax.random.PRNGKey(0)

    # Case 1: tiny graph (single grid step, heavy padding path).
    N, F, F_out = 16, 32, 64
    k_h, k_a, k_w, key = jax.random.split(key, 4)
    h = jax.random.normal(k_h, (N, F), dtype=jnp.float32)
    A = (jax.random.uniform(k_a, (N, N)) > 0.5).astype(jnp.float32)
    A = A + jnp.eye(N, dtype=jnp.float32)          # self-loops, nonzero sum
    W = jax.random.normal(k_w, (F_out, 2 * F), dtype=jnp.float32) * 0.1

    out = mean_agg(h, A, W)
    jax.block_until_ready(out)
    ref = mean_agg_ref(h, A, W)
    assert out.shape == (N, F_out)
    # bf16 MXU inputs (f32 accumulation) -> loosened tolerance vs f32 reference.
    assert jnp.allclose(out, ref, atol=5e-2, rtol=5e-2), \
        float(jnp.max(jnp.abs(out - ref)))

    # Case 2: exercises row tiling, K-axis accumulation and padding
    # (grid = (4, 2) with tm=64, tk=128).
    N2, F2, F_out2 = 200, 48, 96
    k_h, k_a, k_w, key = jax.random.split(key, 4)
    h2 = jax.random.normal(k_h, (N2, F2), dtype=jnp.float32)
    A2 = (jax.random.uniform(k_a, (N2, N2)) > 0.5).astype(jnp.float32)
    A2 = A2 + jnp.eye(N2, dtype=jnp.float32)
    W2 = jax.random.normal(k_w, (F_out2, 2 * F2), dtype=jnp.float32) * 0.1

    out2 = mean_agg(h2, A2, W2, tm=64, tk=128)
    jax.block_until_ready(out2)
    ref2 = mean_agg_ref(h2, A2, W2)
    assert out2.shape == (N2, F_out2)
    assert jnp.allclose(out2, ref2, atol=5e-2, rtol=5e-2), \
        float(jnp.max(jnp.abs(out2 - ref2)))

    print("KERNEL_OK")
</pallas_src>

<mosaic_0001>
module attributes {stable_mosaic.version = 11 : i64} {
  func.func @mean_agg_kernel(%arg0: i32, %arg1: i32, %arg2: memref<16x128xbf16, #tpu.memory_space<vmem>>, %arg3: memref<128x128xbf16, #tpu.memory_space<vmem>>, %arg4: memref<16x128xbf16, #tpu.memory_space<vmem>>, %arg5: memref<128x128xbf16, #tpu.memory_space<vmem>>, %arg6: memref<128x128xbf16, #tpu.memory_space<vmem>>, %arg7: memref<16x128xf32, #tpu.memory_space<vmem>>, %arg8: memref<16x128xf32, #tpu.memory_space<vmem>>) attributes {dimension_semantics = [#tpu.dimension_semantics<parallel>, #tpu.dimension_semantics<arbitrary>], iteration_bounds = array<i64: 1, 1>, scalar_prefetch = 0 : i64, scratch_operands = 1 : i64, tpu.core_type = #tpu.core_type<tc>, window_params = [{transform_indices = @transform_0, window_bounds = array<i64: 16, 128>}, {transform_indices = @transform_1, window_bounds = array<i64: 128, 128>}, {transform_indices = @transform_2, window_bounds = array<i64: 16, 128>}, {pipeline_mode = #tpu.pipeline_mode<synchronous>, transform_indices = @transform_3, window_bounds = array<i64: 128, 128>}, {pipeline_mode = #tpu.pipeline_mode<synchronous>, transform_indices = @transform_4, window_bounds = array<i64: 128, 128>}, {transform_indices = @transform_5, window_bounds = array<i64: 16, 128>}]} {
    %c0_i32 = arith.constant 0 : i32
    %0 = arith.cmpi eq, %arg1, %c0_i32 : i32
    %1 = arith.extui %0 : i1 to i32
    %c0_i32_0 = arith.constant 0 : i32
    %2 = arith.cmpi ne, %1, %c0_i32_0 : i32
    scf.if %2 {
      %cst_10 = arith.constant 0.000000e+00 : f32
      %12 = vector.broadcast %cst_10 : f32 to vector<16x128xf32>
      %c0_11 = arith.constant 0 : index
      %c0_12 = arith.constant 0 : index
      %13 = vector.load %arg8[%c0_11, %c0_12] : memref<16x128xf32, #tpu.memory_space<vmem>>, vector<16x128xf32>
      tpu.vector_store %arg8[%c0_11, %c0_12], %12 {strides = array<i32>} : memref<16x128xf32, #tpu.memory_space<vmem>>, vector<16x128xf32>,
    } else {
    }
    %c0 = arith.constant 0 : index
    %c0_1 = arith.constant 0 : index
    %3 = vector.load %arg8[%c0, %c0_1] : memref<16x128xf32, #tpu.memory_space<vmem>>, vector<16x128xf32>
    %c0_2 = arith.constant 0 : index
    %c0_3 = arith.constant 0 : index
    %4 = vector.load %arg2[%c0_2, %c0_3] : memref<16x128xbf16, #tpu.memory_space<vmem>>, vector<16x128xbf16>
    %c0_4 = arith.constant 0 : index
    %c0_5 = arith.constant 0 : index
    %5 = vector.load %arg3[%c0_4, %c0_5] : memref<128x128xbf16, #tpu.memory_space<vmem>>, vector<128x128xbf16>
    %cst = arith.constant dense<0.000000e+00> : vector<16x128xf32>
    %6 = tpu.matmul %4, %5, %cst {dimension_numbers = #tpu.dot_dimension_numbers<[1], [0], [0], [1], [0, 0, 1, 1], [], []>} : vector<16x128xbf16>, vector<128x128xbf16>, vector<16x128xf32> -> vector<16x128xf32>
    %7 = arith.addf %3, %6 : vector<16x128xf32>
    %c0_6 = arith.constant 0 : index
    %c0_7 = arith.constant 0 : index
    %8 = vector.load %arg8[%c0_6, %c0_7] : memref<16x128xf32, #tpu.memory_space<vmem>>, vector<16x128xf32>
    tpu.vector_store %arg8[%c0_6, %c0_7], %7 {strides = array<i32>} : memref<16x128xf32, #tpu.memory_space<vmem>>, vector<16x128xf32>,
    %c0_i32_8 = arith.constant 0 : i32
    %9 = arith.cmpi eq, %arg1, %c0_i32_8 : i32
    %10 = arith.extui %9 : i1 to i32
    %c0_i32_9 = arith.constant 0 : i32
    %11 = arith.cmpi ne, %10, %c0_i32_9 : i32
    scf.if %11 {
      %c0_10 = arith.constant 0 : index
      %c0_11 = arith.constant 0 : index
      %12 = vector.load %arg8[%c0_10, %c0_11] : memref<16x128xf32, #tpu.memory_space<vmem>>, vector<16x128xf32>
      %13 = arith.truncf %12 : vector<16x128xf32> to vector<16x128xbf16>
      %c0_12 = arith.constant 0 : index
      %c0_13 = arith.constant 0 : index
      %14 = vector.load %arg4[%c0_12, %c0_13] : memref<16x128xbf16, #tpu.memory_space<vmem>>, vector<16x128xbf16>
      %c0_14 = arith.constant 0 : index
      %c0_15 = arith.constant 0 : index
      %15 = vector.load %arg5[%c0_14, %c0_15] : memref<128x128xbf16, #tpu.memory_space<vmem>>, vector<128x128xbf16>
      %cst_16 = arith.constant dense<0.000000e+00> : vector<16x128xf32>
      %16 = tpu.matmul %14, %15, %cst_16 {dimension_numbers = #tpu.dot_dimension_numbers<[1], [0], [0], [1], [0, 0, 1, 1], [], []>} : vector<16x128xbf16>, vector<128x128xbf16>, vector<16x128xf32> -> vector<16x128xf32>
      %c0_17 = arith.constant 0 : index
      %c0_18 = arith.constant 0 : index
      %17 = vector.load %arg6[%c0_17, %c0_18] : memref<128x128xbf16, #tpu.memory_space<vmem>>, vector<128x128xbf16>
      %cst_19 = arith.constant dense<0.000000e+00> : vector<16x128xf32>
      %18 = tpu.matmul %13, %17, %cst_19 {dimension_numbers = #tpu.dot_dimension_numbers<[1], [0], [0], [1], [0, 0, 1, 1], [], []>} : vector<16x128xbf16>, vector<128x128xbf16>, vector<16x128xf32> -> vector<16x128xf32>
      %19 = arith.addf %16, %18 : vector<16x128xf32>
      %cst_20 = arith.constant 0.000000e+00 : f32
      %20 = vector.broadcast %cst_20 : f32 to vector<16x128xf32>
      %21 = arith.maximumf %19, %20 : vector<16x128xf32>
      %c0_21 = arith.constant 0 : index
      %c0_22 = arith.constant 0 : index
      %22 = vector.load %arg7[%c0_21, %c0_22] : memref<16x128xf32, #tpu.memory_space<vmem>>, vector<16x128xf32>
      tpu.vector_store %arg7[%c0_21, %c0_22], %21 {strides = array<i32>} : memref<16x128xf32, #tpu.memory_space<vmem>>, vector<16x128xf32>,
    } else {
    }
    return
  }
  func.func @transform_0(%arg0: i32, %arg1: i32) -> (i32, i32) {
    %c0_i32 = arith.constant 0 : i32
    return %arg0, %arg1 : i32, i32
  }
  func.func @transform_1(%arg0: i32, %arg1: i32) -> (i32, i32) {
    %c0_i32 = arith.constant 0 : i32
    %c0_i32_0 = arith.constant 0 : i32
    return %arg1, %c0_i32 : i32, i32
  }
  func.func @transform_2(%arg0: i32, %arg1: i32) -> (i32, i32) {
    %c0_i32 = arith.constant 0 : i32
    %c0_i32_0 = arith.constant 0 : i32
    return %arg0, %c0_i32 : i32, i32
  }
  func.func @transform_3(%arg0: i32, %arg1: i32) -> (i32, i32) {
    %c0_i32 = arith.constant 0 : i32
    %c0_i32_0 = arith.constant 0 : i32
    %c0_i32_1 = arith.constant 0 : i32
    return %c0_i32, %c0_i32_0 : i32, i32
  }
  func.func @transform_4(%arg0: i32, %arg1: i32) -> (i32, i32) {
    %c0_i32 = arith.constant 0 : i32
    %c0_i32_0 = arith.constant 0 : i32
    %c0_i32_1 = arith.constant 0 : i32
    return %c0_i32, %c0_i32_0 : i32, i32
  }
  func.func @transform_5(%arg0: i32, %arg1: i32) -> (i32, i32) {
    %c0_i32 = arith.constant 0 : i32
    %c0_i32_0 = arith.constant 0 : i32
    return %arg0, %c0_i32 : i32, i32
  }
}

</mosaic_0001>

<llo_original>
// kernel: tpu_custom_call.1
$region0: #{tpu_custom_call.1}
  #allocation0 [shape = 'u32[]', space=smem, size = 0x4, offset = 0x4, fixed_abs, tag = 'smem constant byte address 0x4 - core index']
  #allocation1 [shape = 'u32[144,128]{1,0:T(1,128)}', space=vmem, size = 0x12000, scoped, tag = 'internal scratch']
  #allocation2 [shape = 'f32[16,128]{1,0:T(8,128)}', space=vmem, size = 0x2000, scoped, tag = 'scratch operand']
  %s0 = inlined_call_operand.hbm [shape: bf16[16,128], index: 0, kind: input, shape index: {}]
  %s1 = inlined_call_operand.hbm [shape: bf16[128,128], index: 1, kind: input, shape index: {}]
  %s2 = inlined_call_operand.hbm [shape: bf16[16,128], index: 2, kind: input, shape index: {}]
  %s3 = inlined_call_operand.hbm [shape: bf16[128,128], index: 3, kind: input, shape index: {}]
  %s4 = inlined_call_operand.hbm [shape: bf16[128,128], index: 4, kind: input, shape index: {}]
  %s5 = inlined_call_operand.hbm [shape: f32[16,128], index: 5, kind: output, shape index: {}]
  %s6 = sld [smem:[#allocation0]]
  $region58: #{tpu_custom_call.1} parent=0
    _
  %s8 = ssub.s32 1, %s6
  %s9 = scalar_select 0, %s8, %s6
  $region1: #{tpu_custom_call.1} parent=0
    #allocation3 [shape = 'u8[4096]{0}', space=vmem, size = 0x1000, scoped, tag = 'input window, operand 0, single buffered']
    #allocation4 [shape = 's32[1]{0}', space=sflag, size = 0x4, scoped, tag = 'scoped memory for tpu_custom_call.1']
    #allocation5 [shape = 's32[1]{0}', space=sflag, size = 0x4, scoped, tag = 'scoped memory for tpu_custom_call.1']
    #allocation6 [shape = 'u8[32768]{0}', space=vmem, size = 0x8000, scoped, tag = 'input window, operand 1, single buffered']
    #allocation7 [shape = 's32[1]{0}', space=sflag, size = 0x4, scoped, tag = 'scoped memory for tpu_custom_call.1']
    #allocation8 [shape = 'u8[4096]{0}', space=vmem, size = 0x1000, scoped, tag = 'input window, operand 2, single buffered']
    #allocation9 [shape = 'u8[32768]{0}', space=vmem, size = 0x8000, scoped, tag = 'input window, operand 3, single buffered']
    #allocation10 [shape = 's32[1]{0}', space=sflag, size = 0x4, scoped, tag = 'scoped memory for tpu_custom_call.1']
    #allocation11 [shape = 'u8[32768]{0}', space=vmem, size = 0x8000, scoped, tag = 'input window, operand 4, single buffered']
    #allocation12 [shape = 'u8[8192]{0}', space=vmem, size = 0x2000, scoped, tag = 'output window, operand 0, single buffered']
    %10 = vsyncpa [#allocation4], 0
    %11 = vsyncpa [#allocation7], 0
    %12 = vsyncpa [#allocation10], 0
    %13 = vsyncpa [#allocation5], 0
    // Predicated region
    $region2: #{tpu_custom_call.1} parent=1 // pred_check
      _
    $region3: #{tpu_custom_call.1} parent=1 // pred_check_branch
      %15 = sbr.rel (0) target = $region5
    $region4: #{tpu_custom_call.1} parent=1 // pred_region
      %s17 = ssub.s32 128, 128
      %18 = vsyncadd [#allocation4], %s17
      %s19 = sshll.u32 [#allocation3], 4
      %s20 = int_to_ptr.vmem [resolvable:$true] %s19
      %25 = dma.hbm_to_vmem [thread:$0]  %s0, 128, %s20, [#allocation4], 64, 64, 4
    $region5: #{tpu_custom_call.1} parent=1 // pred_fallthru
      _
    // Predicated region
    $region6: #{tpu_custom_call.1} parent=1 // pred_check
      _
    $region7: #{tpu_custom_call.1} parent=1 // pred_check_branch
      %27 = sbr.rel (0) target = $region9
    $region8: #{tpu_custom_call.1} parent=1 // pred_region
      %s29 = ssub.s32 1024, 1024
      %30 = vsyncadd [#allocation7], %s29
      %s31 = sshll.u32 [#allocation6], 4
      %s32 = int_to_ptr.vmem [resolvable:$true] %s31
      %37 = dma.hbm_to_vmem [thread:$0]  %s1, 1024, %s32, [#allocation7], 64, 64, 4
    $region9: #{tpu_custom_call.1} parent=1 // pred_fallthru
      _
    // Predicated region
    $region10: #{tpu_custom_call.1} parent=1 // pred_check
      _
    $region11: #{tpu_custom_call.1} parent=1 // pred_check_branch
      %39 = sbr.rel (0) target = $region13
    $region12: #{tpu_custom_call.1} parent=1 // pred_region
      %s41 = ssub.s32 128, 128
      %42 = vsyncadd [#allocation7], %s41
      %s43 = sshll.u32 [#allocation8], 4
      %s44 = int_to_ptr.vmem [resolvable:$true] %s43
      %49 = dma.hbm_to_vmem [thread:$0]  %s2, 128, %s44, [#allocation7], 64, 64, 4
    $region13: #{tpu_custom_call.1} parent=1 // pred_fallthru
      _
    // Predicated region
    $region14: #{tpu_custom_call.1} parent=1 // pred_check
      _
    $region15: #{tpu_custom_call.1} parent=1 // pred_check_branch
      %51 = sbr.rel (0) target = $region17
    $region16: #{tpu_custom_call.1} parent=1 // pred_region
      %s53 = ssub.s32 1024, 1024
      %54 = vsyncadd [#allocation10], %s53
      %s55 = sshll.u32 [#allocation9], 4
      %s56 = int_to_ptr.vmem [resolvable:$true] %s55
      %61 = dma.hbm_to_vmem [thread:$0]  %s3, 1024, %s56, [#allocation10], 64, 64, 4
    $region17: #{tpu_custom_call.1} parent=1 // pred_fallthru
      _
    // Predicated region
    $region18: #{tpu_custom_call.1} parent=1 // pred_check
      _
    $region19: #{tpu_custom_call.1} parent=1 // pred_check_branch
      %63 = sbr.rel (0) target = $region21
    $region20: #{tpu_custom_call.1} parent=1 // pred_region
      %s65 = ssub.s32 1024, 1024
      %66 = vsyncadd [#allocation10], %s65
      %s67 = sshll.u32 [#allocation11], 4
      %s68 = int_to_ptr.vmem [resolvable:$true] %s67
      %73 = dma.hbm_to_vmem [thread:$0]  %s4, 1024, %s68, [#allocation10], 64, 64, 4
    $region21: #{tpu_custom_call.1} parent=1 // pred_fallthru
      _
    // Predicated region
    $region22: #{tpu_custom_call.1} parent=1 // pred_check
      _
    $region23: #{tpu_custom_call.1} parent=1 // pred_check_branch
      %75 = sbr.rel (0) target = $region25
    $region24: #{tpu_custom_call.1} parent=1 // pred_region
      %76 = dma.done [#allocation4], 128
    $region25: #{tpu_custom_call.1} parent=1 // pred_fallthru
      _
    // Predicated region
    $region26: #{tpu_custom_call.1} parent=1 // pred_check
      _
    $region27: #{tpu_custom_call.1} parent=1 // pred_check_branch
      %78 = sbr.rel (0) target = $region29
    $region28: #{tpu_custom_call.1} parent=1 // pred_region
      %79 = dma.done [#allocation7], 1024
    $region29: #{tpu_custom_call.1} parent=1 // pred_fallthru
      _
    // Predicated region
    $region30: #{tpu_custom_call.1} parent=1 // pred_check
      _
    $region31: #{tpu_custom_call.1} parent=1 // pred_check_branch
      %81 = sbr.rel (0) target = $region33
    $region32: #{tpu_custom_call.1} parent=1 // pred_region
      %82 = dma.done [#allocation7], 128
    $region33: #{tpu_custom_call.1} parent=1 // pred_fallthru
      _
    // Predicated region
    $region34: #{tpu_custom_call.1} parent=1 // pred_check
      _
    $region35: #{tpu_custom_call.1} parent=1 // pred_check_branch
      %84 = sbr.rel (0) target = $region37
    $region36: #{tpu_custom_call.1} parent=1 // pred_region
      %85 = dma.done [#allocation10], 1024
    $region37: #{tpu_custom_call.1} parent=1 // pred_fallthru
      _
    // Predicated region
    $region38: #{tpu_custom_call.1} parent=1 // pred_check
      _
    $region39: #{tpu_custom_call.1} parent=1 // pred_check_branch
      %87 = sbr.rel (0) target = $region41
    $region40: #{tpu_custom_call.1} parent=1 // pred_region
      %88 = dma.done [#allocation10], 1024
    $region41: #{tpu_custom_call.1} parent=1 // pred_fallthru
      _
    %p90 = scmp.eq.s32.totalorder 0, 0
    // Predicated region
    $region42: #{tpu_custom_call.1} parent=1 // pred_check
      %p91 = pneg %p90
    $region43: #{tpu_custom_call.1} parent=1 // pred_check_branch
      %93 = sbr.rel (%p91) target = $region45
    $region44: #{tpu_custom_call.1} parent=1 // pred_region
      %94 = vst [vmem:[#allocation2] sm:$0xff] 0.0
      %95 = vst [vmem:[#allocation2 + $0x8] sm:$0xff] 0.0
    $region45: #{tpu_custom_call.1} parent=1 // pred_fallthru
      _
    %v96 = vld [vmem:[#allocation2] sm:$0xff]
    %v97 = vld [vmem:[#allocation2 + $0x8] sm:$0xff]
    %v98 = vld [vmem:[#allocation3] sm:$0xf]
    %v99 = vld [vmem:[#allocation3 + $0x4] sm:$0xf]
    %v100 = vld [vmem:[#allocation6] sm:$0xf]
    %v101 = vld [vmem:[#allocation6 + $0x4] sm:$0xf]
    %v102 = vld [vmem:[#allocation6 + $0x8] sm:$0xf]
    %v103 = vld [vmem:[#allocation6 + $0xc] sm:$0xf]
    %v104 = vld [vmem:[#allocation6 + $0x10] sm:$0xf]
    %v105 = vld [vmem:[#allocation6 + $0x14] sm:$0xf]
    %v106 = vld [vmem:[#allocation6 + $0x18] sm:$0xf]
    %v107 = vld [vmem:[#allocation6 + $0x1c] sm:$0xf]
    %v108 = vld [vmem:[#allocation6 + $0x20] sm:$0xf]
    %v109 = vld [vmem:[#allocation6 + $0x24] sm:$0xf]
    %v110 = vld [vmem:[#allocation6 + $0x28] sm:$0xf]
    %v111 = vld [vmem:[#allocation6 + $0x2c] sm:$0xf]
    %v112 = vld [vmem:[#allocation6 + $0x30] sm:$0xf]
    %v113 = vld [vmem:[#allocation6 + $0x34] sm:$0xf]
    %v114 = vld [vmem:[#allocation6 + $0x38] sm:$0xf]
    %v115 = vld [vmem:[#allocation6 + $0x3c] sm:$0xf]
    %v118 = vunpack.c.l.b16 %v98
    %v119 = vunpack.c.l.b16 %v99
    %v120 = vpack.c.b16 %v119, %v118
    %v138 = vunpack.c.l.b16 %v100
    %v139 = vunpack.c.l.b16 %v101
    %v140 = vunpack.c.l.b16 %v102
    %v141 = vunpack.c.l.b16 %v103
    %v142 = vunpack.c.l.b16 %v104
    %v143 = vunpack.c.l.b16 %v105
    %v144 = vunpack.c.l.b16 %v106
    %v145 = vunpack.c.l.b16 %v107
    %v146 = vunpack.c.l.b16 %v108
    %v147 = vunpack.c.l.b16 %v109
    %v148 = vunpack.c.l.b16 %v110
    %v149 = vunpack.c.l.b16 %v111
    %v150 = vunpack.c.l.b16 %v112
    %v151 = vunpack.c.l.b16 %v113
    %v152 = vunpack.c.l.b16 %v114
    %v153 = vunpack.c.l.b16 %v115
    %v154 = vpack.c.b16 %v139, %v138
    %v155 = vpack.c.b16 %v141, %v140
    %v156 = vpack.c.b16 %v143, %v142
    %v157 = vpack.c.b16 %v145, %v144
    %v158 = vpack.c.b16 %v147, %v146
    %v159 = vpack.c.b16 %v149, %v148
    %v160 = vpack.c.b16 %v151, %v150
    %v161 = vpack.c.b16 %v153, %v152
    %170 = vmatprep.subr.bf16.mxu0 0
    %171 = vmatpush1.bf16.msra.mxu0 %v161
    %172 = vmatprep.subr.bf16.mxu0 0
    %173 = vmatpush1.bf16.msra.mxu0 %v160
    %174 = vmatprep.subr.bf16.mxu0 0
    %175 = vmatpush1.bf16.msra.mxu0 %v159
    %176 = vmatprep.subr.bf16.mxu0 0
    %177 = vmatpush1.bf16.msra.mxu0 %v158
    %178 = vmatprep.subr.bf16.mxu0 0
    %179 = vmatpush1.bf16.msra.mxu0 %v157
    %180 = vmatprep.subr.bf16.mxu0 0
    %181 = vmatpush1.bf16.msra.mxu0 %v156
    %182 = vmatprep.subr.bf16.mxu0 0
    %183 = vmatpush1.bf16.msra.mxu0 %v155
    %184 = vmatprep.subr.bf16.mxu0 0
    %185 = vmatpush1.bf16.msra.mxu0 %v154
    %186 = vmatprep.subr.bf16.mxu0 0
    %187 = vmatpush2.bf16.msra.mxu0 0
    %188 = vmatprep.subr.bf16.mxu0 0
    %189 = vmatpush2.bf16.msra.mxu0 0
    %190 = vmatprep.subr.bf16.mxu0 0
    %191 = vmatpush2.bf16.msra.mxu0 0
    %192 = vmatprep.subr.bf16.mxu0 0
    %193 = vmatpush2.bf16.msra.mxu0 0
    %194 = vmatprep.subr.bf16.mxu0 0
    %195 = vmatpush2.bf16.msra.mxu0 0
    %196 = vmatprep.subr.bf16.mxu0 0
    %197 = vmatpush2.bf16.msra.mxu0 0
    %198 = vmatprep.subr.bf16.mxu0 0
    %199 = vmatpush2.bf16.msra.mxu0 0
    %200 = vmatprep.subr.bf16.mxu0 0
    %201 = vmatpush2.bf16.msra.mxu0 0
    %202 = vmatprep.mubr.bf16.mxu0 0
    %203 = vmatmul.mubr.bf16.gmra.mxu0 %v120
    %v204 = vpop.f32.mrf.mxu0
    %v205 = vadd.f32 0.0, %v204
    %v206 = vpop.f32.mrf.mxu0
    %v207 = vpop.f32.mrf.mxu0
    %v208 = vadd.f32 0.0, %v207
    %v209 = vpop.f32.mrf.mxu0
    %210 = vdwg.mxu0
    %v211 = vadd.f32 %v96, %v205
    %v212 = vadd.f32 %v97, %v208
    %213 = vst [vmem:[#allocation2] sm:$0xff] %v211
    %214 = vst [vmem:[#allocation2 + $0x8] sm:$0xff] %v212
    // Predicated region
    $region46: #{tpu_custom_call.1} parent=1 // pred_check
      %p215 = pneg %p90
    $region47: #{tpu_custom_call.1} parent=1 // pred_check_branch
      %217 = sbr.rel (%p215) target = $region49
    $region48: #{tpu_custom_call.1} parent=1 // pred_region
      %v218 = vld [vmem:[#allocation2] sm:$0xff]
      %v219 = vld [vmem:[#allocation2 + $0x8] sm:$0xff]
      %v220 = vpack.c.bf16 %v219, %v218
      %v221 = vld [vmem:[#allocation8] sm:$0xf]
      %v222 = vld [vmem:[#allocation8 + $0x4] sm:$0xf]
      %v223 = vld [vmem:[#allocation9] sm:$0xf]
      %v224 = vld [vmem:[#allocation9 + $0x4] sm:$0xf]
      %v225 = vld [vmem:[#allocation9 + $0x8] sm:$0xf]
      %v226 = vld [vmem:[#allocation9 + $0xc] sm:$0xf]
      %v227 = vld [vmem:[#allocation9 + $0x10] sm:$0xf]
      %v228 = vld [vmem:[#allocation9 + $0x14] sm:$0xf]
      %v229 = vld [vmem:[#allocation9 + $0x18] sm:$0xf]
      %v230 = vld [vmem:[#allocation9 + $0x1c] sm:$0xf]
      %v231 = vld [vmem:[#allocation9 + $0x20] sm:$0xf]
      %v232 = vld [vmem:[#allocation9 + $0x24] sm:$0xf]
      %v233 = vld [vmem:[#allocation9 + $0x28] sm:$0xf]
      %v234 = vld [vmem:[#allocation9 + $0x2c] sm:$0xf]
      %v235 = vld [vmem:[#allocation9 + $0x30] sm:$0xf]
      %v236 = vld [vmem:[#allocation9 + $0x34] sm:$0xf]
      %v237 = vld [vmem:[#allocation9 + $0x38] sm:$0xf]
      %v238 = vld [vmem:[#allocation9 + $0x3c] sm:$0xf]
      %v239 = vld [vmem:[#allocation11] sm:$0xf]
      %v240 = vld [vmem:[#allocation11 + $0x4] sm:$0xf]
      %v241 = vld [vmem:[#allocation11 + $0x8] sm:$0xf]
      %v242 = vld [vmem:[#allocation11 + $0xc] sm:$0xf]
      %v243 = vld [vmem:[#allocation11 + $0x10] sm:$0xf]
      %v244 = vld [vmem:[#allocation11 + $0x14] sm:$0xf]
      %v245 = vld [vmem:[#allocation11 + $0x18] sm:$0xf]
      %v246 = vld [vmem:[#allocation11 + $0x1c] sm:$0xf]
      %v247 = vld [vmem:[#allocation11 + $0x20] sm:$0xf]
      %v248 = vld [vmem:[#allocation11 + $0x24] sm:$0xf]
      %v249 = vld [vmem:[#allocation11 + $0x28] sm:$0xf]
      %v250 = vld [vmem:[#allocation11 + $0x2c] sm:$0xf]
      %v251 = vld [vmem:[#allocation11 + $0x30] sm:$0xf]
      %v252 = vld [vmem:[#allocation11 + $0x34] sm:$0xf]
      %v253 = vld [vmem:[#allocation11 + $0x38] sm:$0xf]
      %v254 = vld [vmem:[#allocation11 + $0x3c] sm:$0xf]
      %v271 = vunpack.c.l.b16 %v239
      %v272 = vunpack.c.l.b16 %v240
      %v273 = vunpack.c.l.b16 %v241
      %v274 = vunpack.c.l.b16 %v242
      %v275 = vunpack.c.l.b16 %v243
      %v276 = vunpack.c.l.b16 %v244
      %v277 = vunpack.c.l.b16 %v245
      %v278 = vunpack.c.l.b16 %v246
      %v279 = vunpack.c.l.b16 %v247
      %v280 = vunpack.c.l.b16 %v248
      %v281 = vunpack.c.l.b16 %v249
      %v282 = vunpack.c.l.b16 %v250
      %v283 = vunpack.c.l.b16 %v251
      %v284 = vunpack.c.l.b16 %v252
      %v285 = vunpack.c.l.b16 %v253
      %v286 = vunpack.c.l.b16 %v254
      %v287 = vpack.c.b16 %v272, %v271
      %v288 = vpack.c.b16 %v274, %v273
      %v289 = vpack.c.b16 %v276, %v275
      %v290 = vpack.c.b16 %v278, %v277
      %v291 = vpack.c.b16 %v280, %v279
      %v292 = vpack.c.b16 %v282, %v281
      %v293 = vpack.c.b16 %v284, %v283
      %v294 = vpack.c.b16 %v286, %v285
      %303 = vmatprep.subr.bf16.mxu0 0
      %304 = vmatpush1.bf16.msra.mxu0 %v294
      %305 = vmatprep.subr.bf16.mxu0 0
      %306 = vmatpush1.bf16.msra.mxu0 %v293
      %307 = vmatprep.subr.bf16.mxu0 0
      %308 = vmatpush1.bf16.msra.mxu0 %v292
      %309 = vmatprep.subr.bf16.mxu0 0
      %310 = vmatpush1.bf16.msra.mxu0 %v291
      %311 = vmatprep.subr.bf16.mxu0 0
      %312 = vmatpush1.bf16.msra.mxu0 %v290
      %313 = vmatprep.subr.bf16.mxu0 0
      %314 = vmatpush1.bf16.msra.mxu0 %v289
      %315 = vmatprep.subr.bf16.mxu0 0
      %316 = vmatpush1.bf16.msra.mxu0 %v288
      %317 = vmatprep.subr.bf16.mxu0 0
      %318 = vmatpush1.bf16.msra.mxu0 %v287
      %319 = vmatprep.subr.bf16.mxu0 0
      %320 = vmatpush2.bf16.msra.mxu0 0
      %321 = vmatprep.subr.bf16.mxu0 0
      %322 = vmatpush2.bf16.msra.mxu0 0
      %323 = vmatprep.subr.bf16.mxu0 0
      %324 = vmatpush2.bf16.msra.mxu0 0
      %325 = vmatprep.subr.bf16.mxu0 0
      %326 = vmatpush2.bf16.msra.mxu0 0
      %327 = vmatprep.subr.bf16.mxu0 0
      %328 = vmatpush2.bf16.msra.mxu0 0
      %329 = vmatprep.subr.bf16.mxu0 0
      %330 = vmatpush2.bf16.msra.mxu0 0
      %331 = vmatprep.subr.bf16.mxu0 0
      %332 = vmatpush2.bf16.msra.mxu0 0
      %333 = vmatprep.subr.bf16.mxu0 0
      %334 = vmatpush2.bf16.msra.mxu0 0
      %335 = vmatprep.mubr.bf16.mxu0 0
      %336 = vmatmul.mubr.bf16.gmra.mxu0 %v220
      %v337 = vpop.f32.mrf.mxu0
      %v338 = vadd.f32 0.0, %v337
      %v339 = vpop.f32.mrf.mxu0
      %v340 = vpop.f32.mrf.mxu0
      %v341 = vadd.f32 0.0, %v340
      %v342 = vpop.f32.mrf.mxu0
      %343 = vdwg.mxu0
      %v346 = vunpack.c.l.b16 %v221
      %v347 = vunpack.c.l.b16 %v222
      %v348 = vpack.c.b16 %v347, %v346
      %v366 = vunpack.c.l.b16 %v223
      %v367 = vunpack.c.l.b16 %v224
      %v368 = vunpack.c.l.b16 %v225
      %v369 = vunpack.c.l.b16 %v226
      %v370 = vunpack.c.l.b16 %v227
      %v371 = vunpack.c.l.b16 %v228
      %v372 = vunpack.c.l.b16 %v229
      %v373 = vunpack.c.l.b16 %v230
      %v374 = vunpack.c.l.b16 %v231
      %v375 = vunpack.c.l.b16 %v232
      %v376 = vunpack.c.l.b16 %v233
      %v377 = vunpack.c.l.b16 %v234
      %v378 = vunpack.c.l.b16 %v235
      %v379 = vunpack.c.l.b16 %v236
      %v380 = vunpack.c.l.b16 %v237
      %v381 = vunpack.c.l.b16 %v238
      %v382 = vpack.c.b16 %v367, %v366
      %v383 = vpack.c.b16 %v369, %v368
      %v384 = vpack.c.b16 %v371, %v370
      %v385 = vpack.c.b16 %v373, %v372
      %v386 = vpack.c.b16 %v375, %v374
      %v387 = vpack.c.b16 %v377, %v376
      %v388 = vpack.c.b16 %v379, %v378
      %v389 = vpack.c.b16 %v381, %v380
      %398 = vmatprep.subr.bf16.mxu0 0
      %399 = vmatpush1.bf16.msra.mxu0 %v389
      %400 = vmatprep.subr.bf16.mxu0 0
      %401 = vmatpush1.bf16.msra.mxu0 %v388
      %402 = vmatprep.subr.bf16.mxu0 0
      %403 = vmatpush1.bf16.msra.mxu0 %v387
      %404 = vmatprep.subr.bf16.mxu0 0
      %405 = vmatpush1.bf16.msra.mxu0 %v386
      %406 = vmatprep.subr.bf16.mxu0 0
      %407 = vmatpush1.bf16.msra.mxu0 %v385
      %408 = vmatprep.subr.bf16.mxu0 0
      %409 = vmatpush1.bf16.msra.mxu0 %v384
      %410 = vmatprep.subr.bf16.mxu0 0
      %411 = vmatpush1.bf16.msra.mxu0 %v383
      %412 = vmatprep.subr.bf16.mxu0 0
      %413 = vmatpush1.bf16.msra.mxu0 %v382
      %414 = vmatprep.subr.bf16.mxu0 0
      %415 = vmatpush2.bf16.msra.mxu0 0
      %416 = vmatprep.subr.bf16.mxu0 0
      %417 = vmatpush2.bf16.msra.mxu0 0
      %418 = vmatprep.subr.bf16.mxu0 0
      %419 = vmatpush2.bf16.msra.mxu0 0
      %420 = vmatprep.subr.bf16.mxu0 0
      %421 = vmatpush2.bf16.msra.mxu0 0
      %422 = vmatprep.subr.bf16.mxu0 0
      %423 = vmatpush2.bf16.msra.mxu0 0
      %424 = vmatprep.subr.bf16.mxu0 0
      %425 = vmatpush2.bf16.msra.mxu0 0
      %426 = vmatprep.subr.bf16.mxu0 0
      %427 = vmatpush2.bf16.msra.mxu0 0
      %428 = vmatprep.subr.bf16.mxu0 0
      %429 = vmatpush2.bf16.msra.mxu0 0
      %430 = vmatprep.mubr.bf16.mxu0 0
      %431 = vmatmul.mubr.bf16.gmra.mxu0 %v348
      %v432 = vpop.f32.mrf.mxu0
      %v433 = vadd.f32 %v338, %v432
      %v434 = vpop.f32.mrf.mxu0
      %v435 = vpop.f32.mrf.mxu0
      %v436 = vadd.f32 %v341, %v435
      %v437 = vpop.f32.mrf.mxu0
      %438 = vdwg.mxu0
      %v439 = vmax.f32 %v433, 0.0
      %v440 = vmax.f32 %v436, 0.0
      %441 = vst [vmem:[#allocation12] sm:$0xff] %v439
      %442 = vst [vmem:[#allocation12 + $0x8] sm:$0xff] %v440
    $region49: #{tpu_custom_call.1} parent=1 // pred_fallthru
      _
    // Predicated region
    $region50: #{tpu_custom_call.1} parent=1 // pred_check
      _
    $region51: #{tpu_custom_call.1} parent=1 // pred_check_branch
      %444 = sbr.rel (0) target = $region53
    $region52: #{tpu_custom_call.1} parent=1 // pred_region
      %s446 = ssub.s32 256, 256
      %447 = vsyncadd [#allocation5], %s446
      %s448 = sshll.u32 [#allocation12], 4
      %s449 = int_to_ptr.vmem [resolvable:$true] %s448
      %454 = dma.vmem_to_hbm [thread:$0]  %s449, 256, %s5, [#allocation5], 128, 128, 8
    $region53: #{tpu_custom_call.1} parent=1 // pred_fallthru
      _
    // Predicated region
    $region54: #{tpu_custom_call.1} parent=1 // pred_check
      _
    $region55: #{tpu_custom_call.1} parent=1 // pred_check_branch
      %456 = sbr.rel (0) target = $region57
    $region56: #{tpu_custom_call.1} parent=1 // pred_region
      %457 = dma.done [#allocation5], 256
    $region57: #{tpu_custom_call.1} parent=1 // pred_fallthru
      _
    %458 = vsyncpa [#allocation4], 1
    %459 = vsyncpa [#allocation7], 1
    %460 = vsyncpa [#allocation10], 1
    %461 = vsyncpa [#allocation5], 1

</llo_original>
